<compile_context>
chip_gen: v7x
topology: tpu7x:2x2x1
jax: 0.10.0
libtpu: 0.0.40
codegen_flags: <defaults>
</compile_context>

<pallas_src>
import functools

import jax
import jax.numpy as jnp
from jax.experimental import pallas as pl
from jax.experimental.pallas import tpu as pltpu

LANE = 128
F32_ITEMSIZE = 4
HBM_BLOCK_BYTES = 4 * 1024 * 1024     # per input, per pipeline buffer (DMA tile)
F32_WORKSET_BYTES = 4 * 1024 * 1024   # cap on the f32-expanded compute tile
VMEM_LIMIT_BYTES = 32 * 1024 * 1024   # explicit: fits v5e/v6e/v7x scoped VMEM


def _detect_num_tensorcores() -> int:
    """Best-effort TensorCore count for the local chip (1 if unknown)."""
    try:
        info = pltpu.get_tpu_info()
    except Exception:
        return 1
    for name in ("num_cores", "core_count", "num_tensorcores", "tensorcore_count"):
        value = getattr(info, name, None)
        if value is None:
            continue
        try:
            value = int(value)
        except (TypeError, ValueError):
            continue
        if value > 0:
            return value
    return 1


def _pick_block_rows(rows: int, itemsize: int) -> int:
    """Dtype-aware row-tile size: big HBM tiles, bounded f32 working set."""
    cap = min(HBM_BLOCK_BYTES // (LANE * itemsize),
              F32_WORKSET_BYTES // (LANE * F32_ITEMSIZE))
    if rows <= cap:
        return rows                     # full-extent block: always legal
    # Keep partial-tile rows a multiple of 32 so every packed dtype's native
    # sublane tiling ((8|16|32), 128) stays aligned.
    return max(32, (cap // 32) * 32)


def _tversky_partial_kernel(yp_ref, yt_ref, acc_ref, *, rows, block_rows,
                            num_blocks, tiles_per_core, multi_core,
                            has_partial, has_overshoot):
    """Accumulate lane-vector partials of (sum(p*t), sum(p), sum(t))."""
    if multi_core:
        c = pl.program_id(0)            # CORE_PARALLEL axis
        j = pl.program_id(1)            # reduction over row tiles (arbitrary)
        g = c * tiles_per_core + j      # logical (unclamped) block id
    else:
        j = pl.program_id(0)
        g = j

    @pl.when(j == 0)
    def _init():
        acc_ref[...] = jnp.zeros_like(acc_ref)

    def partial_sums(p, t):
        # p, t: (r, LANE) f32.  One fused (1, 3, LANE) vreg-level RMW; the
        # cross-lane reduce to scalars happens once, in the wrapper epilogue.
        return jnp.concatenate(
            [
                jnp.sum(p * t, axis=0, keepdims=True),
                jnp.sum(p, axis=0, keepdims=True),
                jnp.sum(t, axis=0, keepdims=True),
            ],
            axis=0,
        )[None]

    if has_partial:
        # Static number of valid rows in the single partial final block.
        limit = rows - (num_blocks - 1) * block_rows

        @pl.when(g < num_blocks - 1)    # common path: full block, mask-free
        def _full():
            acc_ref[...] += partial_sums(yp_ref[...].astype(jnp.float32),
                                         yt_ref[...].astype(jnp.float32))

        @pl.when(g == num_blocks - 1)   # one partial block: static row slice
        def _tail():
            acc_ref[...] += partial_sums(
                yp_ref[:limit, :].astype(jnp.float32),
                yt_ref[:limit, :].astype(jnp.float32))
        # Overshoot blocks (g >= num_blocks, from an uneven core split) fall
        # through both branches and contribute nothing.
    elif multi_core and has_overshoot:
        @pl.when(g < num_blocks)        # skip clamp-duplicated blocks
        def _guarded():
            acc_ref[...] += partial_sums(yp_ref[...].astype(jnp.float32),
                                         yt_ref[...].astype(jnp.float32))
    else:
        acc_ref[...] += partial_sums(yp_ref[...].astype(jnp.float32),
                                     yt_ref[...].astype(jnp.float32))


def tversky_loss(y_pred, y_true, alpha, beta):
    eps = 1e-06
    alpha = float(alpha)
    beta = float(beta)

    yp = jnp.reshape(y_pred, (-1,))     # free for contiguous inputs
    yt = jnp.reshape(y_true, (-1,))
    n = yp.shape[0]

    if n == 0:
        return jnp.float32(0.0)         # tp = fp = fn = 0 -> loss = 0

    if n % LANE != 0:
        # No zero-copy lane-dense 2-D view exists; slicing/padding to build
        # one would materialize a near-full HBM copy of each input, which is
        # worse than the reduction itself for this bandwidth-bound op.  Let
        # XLA do the fused reduction directly on the original buffers.
        # TODO(synk): a 1-D-block Pallas variant could recover the last few %
        # for non-128-multiple sizes without the extra copy.
        ypf = yp.astype(jnp.float32)
        ytf = yt.astype(jnp.float32)
        tp = jnp.sum(ypf * ytf)
        sp = jnp.sum(ypf)
        st = jnp.sum(ytf)
    else:
        rows = n // LANE
        itemsize = max(jnp.dtype(yp.dtype).itemsize, jnp.dtype(yt.dtype).itemsize)
        block_rows = _pick_block_rows(rows, itemsize)
        num_blocks = -(-rows // block_rows)
        has_partial = (rows % block_rows) != 0

        num_cores = max(1, min(_detect_num_tensorcores(), num_blocks))
        tiles_per_core = -(-num_blocks // num_cores)
        has_overshoot = (num_blocks % num_cores) != 0
        multi_core = num_cores >= 2

        # Zero-copy 2-D lane-dense views of the original buffers.
        yp2d = yp.reshape(rows, LANE)
        yt2d = yt.reshape(rows, LANE)

        if multi_core:
            grid = (num_cores, tiles_per_core)

            def in_map(c, j):
                g = c * tiles_per_core + j
                # Clamp overshoot blocks in range; the kernel skips them.
                return (jnp.minimum(g, num_blocks - 1), 0)

            out_spec = pl.BlockSpec((1, 3, LANE), lambda c, j: (c, 0, 0))
            dims = (pltpu.CORE_PARALLEL, pltpu.ARBITRARY)
        else:
            grid = (num_blocks,)

            def in_map(j):
                return (j, 0)

            out_spec = pl.BlockSpec((1, 3, LANE), lambda j: (0, 0, 0))
            dims = (pltpu.ARBITRARY,)

        kernel = functools.partial(
            _tversky_partial_kernel,
            rows=rows,
            block_rows=block_rows,
            num_blocks=num_blocks,
            tiles_per_core=tiles_per_core,
            multi_core=multi_core,
            has_partial=has_partial,
            has_overshoot=has_overshoot,
        )

        in_bytes = n * (jnp.dtype(yp.dtype).itemsize + jnp.dtype(yt.dtype).itemsize)
        out_bytes = num_cores * 3 * LANE * 4
        cost = pl.CostEstimate(
            flops=4 * n,                 # mul + 3 accumulate-adds per element
            transcendentals=0,
            bytes_accessed=in_bytes + out_bytes,
        )

        acc = pl.pallas_call(
            kernel,
            out_shape=jax.ShapeDtypeStruct((num_cores, 3, LANE), jnp.float32),
            grid_spec=pltpu.PrefetchScalarGridSpec(
                num_scalar_prefetch=0,
                grid=grid,
                in_specs=[
                    pl.BlockSpec((block_rows, LANE), in_map),
                    pl.BlockSpec((block_rows, LANE), in_map),
                ],
                out_specs=out_spec,
            ),
            compiler_params=pltpu.CompilerParams(
                dimension_semantics=dims,
                vmem_limit_bytes=VMEM_LIMIT_BYTES,
            ),
            cost_estimate=cost,
        )(yp2d, yt2d)

        sums = jnp.sum(acc, axis=(0, 2))   # tiny O(1) epilogue
        tp, sp, st = sums[0], sums[1], sums[2]

    fp = sp - tp
    fn = st - tp
    tversky = (tp + eps) / (tp + alpha * fp + beta * fn + eps)
    return (1.0 - tversky).astype(jnp.float32)


def tversky_loss_ref(y_pred, y_true, alpha, beta):
    eps = 1e-06
    yp = jnp.reshape(y_pred, (-1,)).astype(jnp.float32)
    yt = jnp.reshape(y_true, (-1,)).astype(jnp.float32)
    tp = jnp.sum(yp * yt)
    fp = jnp.sum(yp) - tp
    fn = jnp.sum(yt) - tp
    tversky = (tp + eps) / (tp + alpha * fp + beta * fn + eps)
    return 1.0 - tversky


if __name__ == "__main__":
    alpha, beta = 0.7, 0.3
    key = jax.random.PRNGKey(0)
    k1, k2, k3, k4 = jax.random.split(key, 4)

    # Primary case: NCHW mask-style inputs, flattened size divisible by 128.
    y_pred = jax.nn.sigmoid(jax.random.normal(k1, (2, 4, 16, 16), jnp.float32))
    y_true = (jax.random.uniform(k2, (2, 4, 16, 16)) > 0.5).astype(jnp.float32)
    loss = jax.block_until_ready(tversky_loss(y_pred, y_true, alpha, beta))
    ref = jax.block_until_ready(tversky_loss_ref(y_pred, y_true, alpha, beta))
    assert jnp.allclose(loss, ref, atol=1e-5, rtol=1e-5), (loss, ref)

    # bf16 inputs exercise the dtype-aware (reduced-HBM-traffic) kernel path.
    yp_bf = y_pred.astype(jnp.bfloat16)
    yt_bf = y_true.astype(jnp.bfloat16)
    loss_bf = jax.block_until_ready(tversky_loss(yp_bf, yt_bf, alpha, beta))
    ref_bf = jax.block_until_ready(tversky_loss_ref(yp_bf, yt_bf, alpha, beta))
    assert jnp.allclose(loss_bf, ref_bf, atol=1e-4, rtol=1e-4), (loss_bf, ref_bf)

    # Non-128-multiple flattened size exercises the copy-free fallback path.
    y_pred_odd = jax.nn.sigmoid(jax.random.normal(k3, (2, 3, 9, 9), jnp.float32))
    y_true_odd = (jax.random.uniform(k4, (2, 3, 9, 9)) > 0.5).astype(jnp.float32)
    loss_odd = jax.block_until_ready(tversky_loss(y_pred_odd, y_true_odd, alpha, beta))
    ref_odd = jax.block_until_ready(tversky_loss_ref(y_pred_odd, y_true_odd, alpha, beta))
    assert jnp.allclose(loss_odd, ref_odd, atol=1e-5, rtol=1e-5), (loss_odd, ref_odd)

    print("KERNEL_OK")
</pallas_src>

<mosaic_0001>
module attributes {stable_mosaic.version = 11 : i64} {
  func.func @_tversky_partial_kernel(%arg0: i32, %arg1: memref<16x128xf32, #tpu.memory_space<vmem>>, %arg2: memref<16x128xf32, #tpu.memory_space<vmem>>, %arg3: memref<1x3x128xf32, #tpu.memory_space<vmem>>) attributes {dimension_semantics = [#tpu.dimension_semantics<arbitrary>], iteration_bounds = array<i64: 1>, scalar_prefetch = 0 : i64, scratch_operands = 0 : i64, tpu.core_type = #tpu.core_type<tc>, window_params = [{transform_indices = @transform_0, window_bounds = array<i64: 16, 128>}, {transform_indices = @transform_1, window_bounds = array<i64: 16, 128>}, {pipeline_mode = #tpu.pipeline_mode<synchronous>, transform_indices = @transform_2, window_bounds = array<i64: 1, 3, 128>}]} {
    %c0_i32 = arith.constant 0 : i32
    %0 = arith.cmpi eq, %arg0, %c0_i32 : i32
    %1 = arith.extui %0 : i1 to i32
    %c0_i32_0 = arith.constant 0 : i32
    %2 = arith.cmpi ne, %1, %c0_i32_0 : i32
    scf.if %2 {
      %cst_12 = arith.constant 0.000000e+00 : f32
      %17 = vector.broadcast %cst_12 : f32 to vector<1x3x128xf32>
      %c0_13 = arith.constant 0 : index
      %c0_14 = arith.constant 0 : index
      %c0_15 = arith.constant 0 : index
      %18 = vector.load %arg3[%c0_13, %c0_14, %c0_15] : memref<1x3x128xf32, #tpu.memory_space<vmem>>, vector<1x3x128xf32>
      tpu.vector_store %arg3[%c0_13, %c0_14, %c0_15], %17 {strides = array<i32>} : memref<1x3x128xf32, #tpu.memory_space<vmem>>, vector<1x3x128xf32>,
    } else {
    }
    %c0 = arith.constant 0 : index
    %c0_1 = arith.constant 0 : index
    %c0_2 = arith.constant 0 : index
    %3 = vector.load %arg3[%c0, %c0_1, %c0_2] : memref<1x3x128xf32, #tpu.memory_space<vmem>>, vector<1x3x128xf32>
    %c0_3 = arith.constant 0 : index
    %c0_4 = arith.constant 0 : index
    %4 = vector.load %arg1[%c0_3, %c0_4] : memref<16x128xf32, #tpu.memory_space<vmem>>, vector<16x128xf32>
    %c0_5 = arith.constant 0 : index
    %c0_6 = arith.constant 0 : index
    %5 = vector.load %arg2[%c0_5, %c0_6] : memref<16x128xf32, #tpu.memory_space<vmem>>, vector<16x128xf32>
    %6 = arith.mulf %4, %5 : vector<16x128xf32>
    %cst = arith.constant dense<0.000000e+00> : vector<128xf32>
    %7 = vector.multi_reduction <add>, %6, %cst [0] : vector<16x128xf32> to vector<128xf32>
    %8 = vector.shape_cast %7 : vector<128xf32> to vector<1x128xf32>
    %cst_7 = arith.constant dense<0.000000e+00> : vector<128xf32>
    %9 = vector.multi_reduction <add>, %4, %cst_7 [0] : vector<16x128xf32> to vector<128xf32>
    %10 = vector.shape_cast %9 : vector<128xf32> to vector<1x128xf32>
    %cst_8 = arith.constant dense<0.000000e+00> : vector<128xf32>
    %11 = vector.multi_reduction <add>, %5, %cst_8 [0] : vector<16x128xf32> to vector<128xf32>
    %12 = vector.shape_cast %11 : vector<128xf32> to vector<1x128xf32>
    %13 = tpu.concatenate %8, %10, %12 in 0 : vector<1x128xf32>, vector<1x128xf32>, vector<1x128xf32> -> vector<3x128xf32>
    %14 = vector.shape_cast %13 : vector<3x128xf32> to vector<1x3x128xf32>
    %15 = arith.addf %3, %14 : vector<1x3x128xf32>
    %c0_9 = arith.constant 0 : index
    %c0_10 = arith.constant 0 : index
    %c0_11 = arith.constant 0 : index
    %16 = vector.load %arg3[%c0_9, %c0_10, %c0_11] : memref<1x3x128xf32, #tpu.memory_space<vmem>>, vector<1x3x128xf32>
    tpu.vector_store %arg3[%c0_9, %c0_10, %c0_11], %15 {strides = array<i32>} : memref<1x3x128xf32, #tpu.memory_space<vmem>>, vector<1x3x128xf32>,
    return
  }
  func.func @transform_0(%arg0: i32) -> (i32, i32) {
    %c0_i32 = arith.constant 0 : i32
    %c0_i32_0 = arith.constant 0 : i32
    return %arg0, %c0_i32 : i32, i32
  }
  func.func @transform_1(%arg0: i32) -> (i32, i32) {
    %c0_i32 = arith.constant 0 : i32
    %c0_i32_0 = arith.constant 0 : i32
    return %arg0, %c0_i32 : i32, i32
  }
  func.func @transform_2(%arg0: i32) -> (i32, i32, i32) {
    %c0_i32 = arith.constant 0 : i32
    %c0_i32_0 = arith.constant 0 : i32
    %c0_i32_1 = arith.constant 0 : i32
    %c0_i32_2 = arith.constant 0 : i32
    return %c0_i32, %c0_i32_0, %c0_i32_1 : i32, i32, i32
  }
}

</mosaic_0001>

<llo_original>
// kernel: tpu_custom_call.1
$region0: #{tpu_custom_call.1}
  #allocation0 [shape = 'u32[]', space=smem, size = 0x4, offset = 0x4, fixed_abs, tag = 'smem constant byte address 0x4 - core index']
  #allocation1 [shape = 'u32[144,128]{1,0:T(1,128)}', space=vmem, size = 0x12000, scoped, tag = 'internal scratch']
  %s0 = inlined_call_operand.hbm [shape: f32[16,128], index: 0, kind: input, shape index: {}]
  %s1 = inlined_call_operand.hbm [shape: f32[16,128], index: 1, kind: input, shape index: {}]
  %s2 = inlined_call_operand.vmem [shape: f32[1,3,128], index: 2, kind: output, shape index: {}]
  %s3 = sld [smem:[#allocation0]]
  $region30: #{tpu_custom_call.1} parent=0
    _
  %s5 = ssub.s32 1, %s3
  %s6 = scalar_select 0, %s5, %s3
  $region1: #{tpu_custom_call.1} parent=0
    #allocation2 [shape = 'u8[8192]{0}', space=vmem, size = 0x2000, scoped, tag = 'input window, operand 0, single buffered']
    #allocation3 [shape = 's32[1]{0}', space=sflag, size = 0x4, scoped, tag = 'scoped memory for tpu_custom_call.1']
    #allocation4 [shape = 'u8[8192]{0}', space=vmem, size = 0x2000, scoped, tag = 'input window, operand 1, single buffered']
    #allocation5 [shape = 's32[1]{0}', space=sflag, size = 0x4, scoped, tag = 'scoped memory for tpu_custom_call.1']
    %7 = vsyncpa [#allocation3], 0
    %8 = vsyncpa [#allocation5], 0
    // Predicated region
    $region2: #{tpu_custom_call.1} parent=1 // pred_check
      _
    $region3: #{tpu_custom_call.1} parent=1 // pred_check_branch
      %10 = sbr.rel (0) target = $region5
    $region4: #{tpu_custom_call.1} parent=1 // pred_region
      %s12 = ssub.s32 256, 256
      %13 = vsyncadd [#allocation3], %s12
      %s14 = sshll.u32 [#allocation2], 4
      %s15 = int_to_ptr.vmem [resolvable:$true] %s14
      %20 = dma.hbm_to_vmem [thread:$0]  %s0, 256, %s15, [#allocation3], 128, 128, 8
    $region5: #{tpu_custom_call.1} parent=1 // pred_fallthru
      _
    // Predicated region
    $region6: #{tpu_custom_call.1} parent=1 // pred_check
      _
    $region7: #{tpu_custom_call.1} parent=1 // pred_check_branch
      %22 = sbr.rel (0) target = $region9
    $region8: #{tpu_custom_call.1} parent=1 // pred_region
      %s24 = ssub.s32 256, 256
      %25 = vsyncadd [#allocation5], %s24
      %s26 = sshll.u32 [#allocation4], 4
      %s27 = int_to_ptr.vmem [resolvable:$true] %s26
      %32 = dma.hbm_to_vmem [thread:$0]  %s1, 256, %s27, [#allocation5], 128, 128, 8
    $region9: #{tpu_custom_call.1} parent=1 // pred_fallthru
      _
    // Predicated region
    $region10: #{tpu_custom_call.1} parent=1 // pred_check
      _
    $region11: #{tpu_custom_call.1} parent=1 // pred_check_branch
      %34 = sbr.rel (0) target = $region13
    $region12: #{tpu_custom_call.1} parent=1 // pred_region
      %35 = dma.done [#allocation3], 256
    $region13: #{tpu_custom_call.1} parent=1 // pred_fallthru
      _
    // Predicated region
    $region14: #{tpu_custom_call.1} parent=1 // pred_check
      _
    $region15: #{tpu_custom_call.1} parent=1 // pred_check_branch
      %37 = sbr.rel (0) target = $region17
    $region16: #{tpu_custom_call.1} parent=1 // pred_region
      %38 = dma.done [#allocation5], 256
    $region17: #{tpu_custom_call.1} parent=1 // pred_fallthru
      _
    %p39 = scmp.eq.s32.totalorder 0, 0
    // Predicated region
    $region18: #{tpu_custom_call.1} parent=1 // pred_check
      %p40 = pneg %p39
    $region19: #{tpu_custom_call.1} parent=1 // pred_check_branch
      %42 = sbr.rel (%p40) target = $region21
    $region20: #{tpu_custom_call.1} parent=1 // pred_region
      %43 = vst [vmem:[%s2] sm:$0x7] 0.0
    $region21: #{tpu_custom_call.1} parent=1 // pred_fallthru
      _
    %v44 = vld [vmem:[%s2] sm:$0x7]
    %v45 = vld [vmem:[#allocation2] sm:$0xff]
    %v46 = vld [vmem:[#allocation2 + $0x8] sm:$0xff]
    %v47 = vld [vmem:[#allocation4] sm:$0xff]
    %v48 = vld [vmem:[#allocation4 + $0x8] sm:$0xff]
    %v49 = vmul.f32 %v45, %v47
    %v50 = vmul.f32 %v46, %v48
    %v51 = vadd.f32 %v49, %v50
    %v52 = vrot.slane %v51, 4
    %v53 = vadd.f32 %v51, %v52
    %v54 = vrot.slane %v53, 2
    %v55 = vadd.f32 %v53, %v54
    %v56 = vrot.slane %v55, 1
    %v57 = vadd.f32 %v55, %v56
    %v58 = vadd.f32 %v45, %v46
    %v59 = vrot.slane %v58, 4
    %v60 = vadd.f32 %v58, %v59
    %v61 = vrot.slane %v60, 2
    %v62 = vadd.f32 %v60, %v61
    %v63 = vrot.slane %v62, 1
    %v64 = vadd.f32 %v62, %v63
    %v65 = vadd.f32 %v47, %v48
    %v66 = vrot.slane %v65, 4
    %v67 = vadd.f32 %v65, %v66
    %v68 = vrot.slane %v67, 2
    %v69 = vadd.f32 %v67, %v68
    %v70 = vrot.slane %v69, 1
    %v71 = vadd.f32 %v69, %v70
    %vm72 = vcmask 1040384
    %v73 = vsel %vm72, %v57, %v64
    %vm74 = vcmask 1041408
    %v75 = vsel %vm74, %v73, %v71
    %v76 = vadd.f32 %v44, %v75
    %77 = vst [vmem:[%s2] sm:$0x7] %v76
    // Predicated region
    $region22: #{tpu_custom_call.1} parent=1 // pred_check
      _
    $region23: #{tpu_custom_call.1} parent=1 // pred_check_branch
      %79 = sbr.rel (0) target = $region25
    $region24: #{tpu_custom_call.1} parent=1 // pred_region
      _
    $region25: #{tpu_custom_call.1} parent=1 // pred_fallthru
      _
    // Predicated region
    $region26: #{tpu_custom_call.1} parent=1 // pred_check
      _
    $region27: #{tpu_custom_call.1} parent=1 // pred_check_branch
      %81 = sbr.rel (0) target = $region29
    $region28: #{tpu_custom_call.1} parent=1 // pred_region
      _
    $region29: #{tpu_custom_call.1} parent=1 // pred_fallthru
      _
    %82 = vsyncpa [#allocation3], 1
    %83 = vsyncpa [#allocation5], 1

</llo_original>
